<compile_context>
chip_gen: v6e
topology: v6e:2x2x1
jax: 0.10.0
libtpu: 0.0.40
codegen_flags: <defaults>
</compile_context>

<pallas_src>
import jax
import jax.numpy as jnp
from jax import lax
from jax.experimental import pallas as pl
from jax.experimental.pallas import tpu as pltpu

# ----- "config.yaml" equivalents (synthetic, deterministic) -----------------
ID_EMB_DIM = 8
SML_EMB_DIM = 4
FEAT_DIM = 20
INPUT_SIZE = ID_EMB_DIM + SML_EMB_DIM + FEAT_DIM  # 32
HIDDEN_SIZE = 32
NUM_OF_IDS = 16
NUM_OF_CLASSES = 8
SML_VOCAB = 3
SML_VOCAB_PAD = 8  # zero-pad the tiny sml vocab for a clean one-hot layout


def _round_up(n, m):
    return ((n + m - 1) // m) * m


def _pick_tile_b(batch, max_tile_b):
    """Batch tile (multiple of 128): as large as allowed, balanced so padding
    stays below one 128-lane group per tile, and capped so the grid keeps
    >= 2 steps (lets dimension_semantics=("parallel",) use both v7x TCs)."""
    m = -(-max(batch, 1) // 128)                 # 128-lane groups needed
    max_k = max(1, min(max_tile_b // 128, m))
    if m >= 2:
        max_k = min(max_k, -(-m // 2))           # keep >= 2 grid steps
    n_tiles = -(-m // max_k)
    return (-(-m // n_tiles)) * 128


def mlp_kernel(ids_ref, x_ref,
               w1id_ref, w1sml_ref, w1x_ref, b1_ref,
               w2_ref, b2_ref, w3_ref, b3_ref, w4_ref, b4_ref,
               w5_ref, b5_ref, o_ref):
    """Fused one-hot embedding matmuls (tables pre-folded into W1) + 5-layer MLP.

    All activations are [rows, TILE_B]: batch on the lane axis.
    Dots run in the weight dtype (f32 or bf16) with f32 accumulation; all
    elementwise math (bias add, ReLU, one-hot build) stays f32.
    """
    f32 = jnp.float32
    cdt = w1x_ref.dtype                      # MXU operand dtype (f32 or bf16)
    tile_b = o_ref.shape[-1]

    sid = ids_ref[0:1, :]                    # [1, TILE_B] int32
    sml = ids_ref[1:2, :]                    # [1, TILE_B] int32

    # One-hot selection matrices (vocab on sublanes, batch on lanes).
    oh_id = (lax.broadcasted_iota(jnp.int32, (NUM_OF_IDS, tile_b), 0)
             == sid).astype(f32).astype(cdt)                 # [16, TILE_B]
    oh_sml = (lax.broadcasted_iota(jnp.int32, (SML_VOCAB_PAD, tile_b), 0)
              == sml).astype(f32).astype(cdt)                # [8,  TILE_B]

    # Layer 1: embedding tables are folded into W1 offline, and x is consumed
    # in its natural [TILE_B, FEAT_DIM] layout by contracting its last dim.
    nt = (((1,), (1,)), ((), ()))            # lhs @ rhs.T
    h = (jnp.dot(w1id_ref[...], oh_id, preferred_element_type=f32)
         + jnp.dot(w1sml_ref[...], oh_sml, preferred_element_type=f32)
         + lax.dot_general(w1x_ref[...], x_ref[...].astype(cdt), nt,
                           preferred_element_type=f32)
         + b1_ref[...])
    h = jnp.maximum(h, 0.0)

    for w_ref, b_ref in ((w2_ref, b2_ref), (w3_ref, b3_ref), (w4_ref, b4_ref)):
        h = jnp.maximum(jnp.dot(w_ref[...], h.astype(cdt),
                                preferred_element_type=f32) + b_ref[...], 0.0)

    o_ref[...] = (jnp.dot(w5_ref[...], h.astype(cdt),
                          preferred_element_type=f32)
                  + b5_ref[...]).astype(o_ref.dtype)


def init_params(key):
    """Deterministic init matching the PyTorch module's shapes.

    Linear weights are stored as [in, out] (PyTorch W.T); the kernel-side
    transposed/folded copies are built once by prepare_kernel_params()."""
    keys = jax.random.split(key, 12)

    def lin(kw, kb, d_in, d_out):
        scale = 1.0 / jnp.sqrt(d_in)
        w = jax.random.uniform(kw, (d_in, d_out), jnp.float32, -scale, scale)
        b = jax.random.uniform(kb, (1, d_out), jnp.float32, -scale, scale)
        return w, b

    params = {
        "id_emb": jax.random.normal(keys[0], (NUM_OF_IDS, ID_EMB_DIM), jnp.float32),
        "sml_emb": jax.random.normal(keys[1], (SML_VOCAB, SML_EMB_DIM), jnp.float32),
    }
    params["w1"], params["b1"] = lin(keys[2], keys[3], INPUT_SIZE, HIDDEN_SIZE)
    params["w2"], params["b2"] = lin(keys[4], keys[5], HIDDEN_SIZE, HIDDEN_SIZE)
    params["w3"], params["b3"] = lin(keys[6], keys[7], HIDDEN_SIZE, HIDDEN_SIZE)
    params["w4"], params["b4"] = lin(keys[8], keys[9], HIDDEN_SIZE, HIDDEN_SIZE)
    params["w5"], params["b5"] = lin(keys[10], keys[11], HIDDEN_SIZE, NUM_OF_CLASSES)
    return params


def prepare_kernel_params(params, dtype=jnp.float32):
    """One-time offline re-layout:
      * weights -> [out, in], biases -> [out, 1] (biases always f32),
      * embedding tables folded into the W1 column blocks (associativity):
        w1_id <- W1_id @ E_id^T  ([32,16]),  w1_sml <- W1_sml @ E_sml_pad^T ([32,8]),
      * optional bf16 cast of all MXU weight operands (v6e/v7x HBM/vreg win;
        accumulation stays f32 in-kernel)."""
    f32 = jnp.float32
    id_embT = params["id_emb"].T                                   # [8, 16]
    sml_embT = jnp.pad(params["sml_emb"].T,
                       ((0, 0), (0, SML_VOCAB_PAD - SML_VOCAB)))   # [4, 8]

    w1T = params["w1"].T                                           # [32, 32]
    w1_id = w1T[:, :ID_EMB_DIM]                                    # [32, 8]
    w1_sml = w1T[:, ID_EMB_DIM:ID_EMB_DIM + SML_EMB_DIM]           # [32, 4]
    w1_x = w1T[:, ID_EMB_DIM + SML_EMB_DIM:]                       # [32, 20]

    kp = {
        "w1_id": (w1_id @ id_embT).astype(dtype),                  # [32, 16]
        "w1_sml": (w1_sml @ sml_embT).astype(dtype),               # [32, 8]
        "w1_x": w1_x.astype(dtype),                                # [32, 20]
    }
    for i in (2, 3, 4, 5):
        kp[f"w{i}"] = params[f"w{i}"].T.astype(dtype)              # [out, in]
    for i in (1, 2, 3, 4, 5):
        kp[f"b{i}"] = params[f"b{i}"].reshape(-1, 1).astype(f32)   # [out, 1]
    return kp


def mlp_forward(stock_id, sml, x, kp, *, max_tile_b=2048, transpose_output=True):
    """Run the fused kernel. Inputs are PyTorch-style [B] ids and [B, FEAT_DIM] x.

    max_tile_b: 2048 is safe on every generation (v5e vector-store cap);
    v6e/v7x can pass 4096.  transpose_output=False returns [NUM_OF_CLASSES, B]
    and skips the final wrapper transpose for consumers that accept it."""
    B = x.shape[0]
    tile_b = _pick_tile_b(B, max_tile_b)
    Bp = _round_up(B, tile_b)
    pad = Bp - B

    # Pack both id streams into one [2, B] int32 array -> a single BlockSpec/DMA.
    # TODO(synk): accept ids pre-packed as [2, B] (and x as bf16) upstream to
    # drop even this small wrapper copy.
    ids = jnp.stack([stock_id.astype(jnp.int32), sml.astype(jnp.int32)], axis=0)
    if pad:  # skip the pad pass entirely when B is already a tile multiple
        ids = jnp.pad(ids, ((0, 0), (0, pad)))     # padded ids are 0 (valid rows)
        x = jnp.pad(x, ((0, pad), (0, 0)))

    grid = (Bp // tile_b,)

    def resident(arr):   # full-array block, constant index -> stays VMEM-resident
        return pl.BlockSpec(arr.shape, lambda i: (0, 0))

    weights = (kp["w1_id"], kp["w1_sml"], kp["w1_x"], kp["b1"],
               kp["w2"], kp["b2"], kp["w3"], kp["b3"],
               kp["w4"], kp["b4"], kp["w5"], kp["b5"])

    out_t = pl.pallas_call(
        mlp_kernel,
        out_shape=jax.ShapeDtypeStruct((NUM_OF_CLASSES, Bp), jnp.float32),
        grid=grid,
        in_specs=[pl.BlockSpec((2, tile_b), lambda i: (0, i)),         # ids
                  pl.BlockSpec((tile_b, FEAT_DIM), lambda i: (i, 0))]  # x
                 + [resident(w) for w in weights],
        out_specs=pl.BlockSpec((NUM_OF_CLASSES, tile_b), lambda i: (0, i)),
        compiler_params=pltpu.CompilerParams(
            dimension_semantics=("parallel",)),
    )(ids, x, *weights)

    out_t = out_t[:, :B]
    return out_t.T if transpose_output else out_t                  # [B, C] / [C, B]


def mlp_reference(stock_id, sml, x, params):
    """Pure-JAX reference of the PyTorch forward for correctness checks."""
    h = jnp.concatenate(
        [params["id_emb"][stock_id], params["sml_emb"][sml], x], axis=1)
    h = jnp.maximum(h @ params["w1"] + params["b1"], 0.0)
    h = jnp.maximum(h @ params["w2"] + params["b2"], 0.0)
    h = jnp.maximum(h @ params["w3"] + params["b3"], 0.0)
    h = jnp.maximum(h @ params["w4"] + params["b4"], 0.0)
    return h @ params["w5"] + params["b5"]


if __name__ == "__main__":
    key = jax.random.PRNGKey(0)
    k_param, k_id, k_sml, k_x = jax.random.split(key, 4)

    params = init_params(k_param)
    kp_f32 = prepare_kernel_params(params)

    # Case 1: tiny batch (single 128-wide tile, single grid step).
    B1 = 8
    sid1 = jax.random.randint(k_id, (B1,), 0, NUM_OF_IDS, dtype=jnp.int32)
    sml1 = jax.random.randint(k_sml, (B1,), 0, SML_VOCAB, dtype=jnp.int32)
    x1 = jax.random.normal(k_x, (B1, FEAT_DIM), jnp.float32)
    out1 = jax.block_until_ready(mlp_forward(sid1, sml1, x1, kp_f32))
    ref1 = mlp_reference(sid1, sml1, x1, params)
    assert out1.shape == (B1, NUM_OF_CLASSES)
    assert jnp.allclose(out1, ref1, atol=1e-4, rtol=1e-4)

    # Case 2: multi-step grid, B not a multiple of 128 (padding + index_map path).
    B2 = 300
    kk = jax.random.split(jax.random.PRNGKey(1), 3)
    sid2 = jax.random.randint(kk[0], (B2,), 0, NUM_OF_IDS, dtype=jnp.int32)
    sml2 = jax.random.randint(kk[1], (B2,), 0, SML_VOCAB, dtype=jnp.int32)
    x2 = jax.random.normal(kk[2], (B2, FEAT_DIM), jnp.float32)
    out2 = jax.block_until_ready(mlp_forward(sid2, sml2, x2, kp_f32))
    ref2 = mlp_reference(sid2, sml2, x2, params)
    assert out2.shape == (B2, NUM_OF_CLASSES)
    assert jnp.allclose(out2, ref2, atol=1e-4, rtol=1e-4)

    # Case 3: bf16 weights + bf16 x (v6e/v7x HBM-traffic optimization);
    # f32 accumulation keeps results close to the f32 reference.
    kp_bf16 = prepare_kernel_params(params, dtype=jnp.bfloat16)
    out3 = jax.block_until_ready(
        mlp_forward(sid2, sml2, x2.astype(jnp.bfloat16), kp_bf16))
    assert out3.shape == (B2, NUM_OF_CLASSES)
    assert jnp.allclose(out3, ref2, atol=1e-1, rtol=1e-1)

    print("KERNEL_OK")
</pallas_src>

<mosaic_0001>
module attributes {stable_mosaic.version = 11 : i64} {
  func.func @mlp_kernel(%arg0: i32, %arg1: memref<2x128xi32, #tpu.memory_space<vmem>>, %arg2: memref<128x20xf32, #tpu.memory_space<vmem>>, %arg3: memref<32x16xf32, #tpu.memory_space<vmem>>, %arg4: memref<32x8xf32, #tpu.memory_space<vmem>>, %arg5: memref<32x20xf32, #tpu.memory_space<vmem>>, %arg6: memref<32x1xf32, #tpu.memory_space<vmem>>, %arg7: memref<32x32xf32, #tpu.memory_space<vmem>>, %arg8: memref<32x1xf32, #tpu.memory_space<vmem>>, %arg9: memref<32x32xf32, #tpu.memory_space<vmem>>, %arg10: memref<32x1xf32, #tpu.memory_space<vmem>>, %arg11: memref<32x32xf32, #tpu.memory_space<vmem>>, %arg12: memref<32x1xf32, #tpu.memory_space<vmem>>, %arg13: memref<8x32xf32, #tpu.memory_space<vmem>>, %arg14: memref<8x1xf32, #tpu.memory_space<vmem>>, %arg15: memref<8x128xf32, #tpu.memory_space<vmem>>) attributes {dimension_semantics = [#tpu.dimension_semantics<parallel>], iteration_bounds = array<i64: 1>, scalar_prefetch = 0 : i64, scratch_operands = 0 : i64, tpu.core_type = #tpu.core_type<tc>, window_params = [{transform_indices = @transform_0, window_bounds = array<i64: 2, 128>}, {transform_indices = @transform_1, window_bounds = array<i64: 128, 20>}, {pipeline_mode = #tpu.pipeline_mode<synchronous>, transform_indices = @transform_2, window_bounds = array<i64: 32, 16>}, {pipeline_mode = #tpu.pipeline_mode<synchronous>, transform_indices = @transform_3, window_bounds = array<i64: 32, 8>}, {pipeline_mode = #tpu.pipeline_mode<synchronous>, transform_indices = @transform_4, window_bounds = array<i64: 32, 20>}, {pipeline_mode = #tpu.pipeline_mode<synchronous>, transform_indices = @transform_5, window_bounds = array<i64: 32, 1>}, {pipeline_mode = #tpu.pipeline_mode<synchronous>, transform_indices = @transform_6, window_bounds = array<i64: 32, 32>}, {pipeline_mode = #tpu.pipeline_mode<synchronous>, transform_indices = @transform_7, window_bounds = array<i64: 32, 1>}, {pipeline_mode = #tpu.pipeline_mode<synchronous>, transform_indices = @transform_8, window_bounds = array<i64: 32, 32>}, {pipeline_mode = #tpu.pipeline_mode<synchronous>, transform_indices = @transform_9, window_bounds = array<i64: 32, 1>}, {pipeline_mode = #tpu.pipeline_mode<synchronous>, transform_indices = @transform_10, window_bounds = array<i64: 32, 32>}, {pipeline_mode = #tpu.pipeline_mode<synchronous>, transform_indices = @transform_11, window_bounds = array<i64: 32, 1>}, {pipeline_mode = #tpu.pipeline_mode<synchronous>, transform_indices = @transform_12, window_bounds = array<i64: 8, 32>}, {pipeline_mode = #tpu.pipeline_mode<synchronous>, transform_indices = @transform_13, window_bounds = array<i64: 8, 1>}, {transform_indices = @transform_14, window_bounds = array<i64: 8, 128>}]} {
    %c0 = arith.constant 0 : index
    %c0_0 = arith.constant 0 : index
    %0 = vector.load %arg1[%c0, %c0_0] : memref<2x128xi32, #tpu.memory_space<vmem>>, vector<1x128xi32>
    %c1 = arith.constant 1 : index
    %c0_1 = arith.constant 0 : index
    %1 = vector.load %arg1[%c1, %c0_1] : memref<2x128xi32, #tpu.memory_space<vmem>>, vector<1x128xi32>
    %2 = tpu.iota {dimensions = array<i32: 0>} : vector<16x128xi32>
    %3 = vector.broadcast %0 : vector<1x128xi32> to vector<16x128xi32>
    %4 = arith.cmpi eq, %2, %3 : vector<16x128xi32>
    %5 = arith.extui %4 : vector<16x128xi1> to vector<16x128xi32>
    %6 = arith.sitofp %5 : vector<16x128xi32> to vector<16x128xf32>
    %7 = tpu.iota {dimensions = array<i32: 0>} : vector<8x128xi32>
    %8 = vector.broadcast %1 : vector<1x128xi32> to vector<8x128xi32>
    %9 = arith.cmpi eq, %7, %8 : vector<8x128xi32>
    %10 = arith.extui %9 : vector<8x128xi1> to vector<8x128xi32>
    %11 = arith.sitofp %10 : vector<8x128xi32> to vector<8x128xf32>
    %c0_2 = arith.constant 0 : index
    %c0_3 = arith.constant 0 : index
    %12 = vector.load %arg3[%c0_2, %c0_3] : memref<32x16xf32, #tpu.memory_space<vmem>>, vector<32x16xf32>
    %cst = arith.constant dense<0.000000e+00> : vector<32x128xf32>
    %13 = tpu.matmul %12, %6, %cst {dimension_numbers = #tpu.dot_dimension_numbers<[1], [0], [0], [1], [0, 0, 1, 1], [], []>} : vector<32x16xf32>, vector<16x128xf32>, vector<32x128xf32> -> vector<32x128xf32>
    %c0_4 = arith.constant 0 : index
    %c0_5 = arith.constant 0 : index
    %14 = vector.load %arg4[%c0_4, %c0_5] : memref<32x8xf32, #tpu.memory_space<vmem>>, vector<32x8xf32>
    %cst_6 = arith.constant dense<0.000000e+00> : vector<32x128xf32>
    %15 = tpu.matmul %14, %11, %cst_6 {dimension_numbers = #tpu.dot_dimension_numbers<[1], [0], [0], [1], [0, 0, 1, 1], [], []>} : vector<32x8xf32>, vector<8x128xf32>, vector<32x128xf32> -> vector<32x128xf32>
    %16 = arith.addf %13, %15 : vector<32x128xf32>
    %c0_7 = arith.constant 0 : index
    %c0_8 = arith.constant 0 : index
    %17 = vector.load %arg5[%c0_7, %c0_8] : memref<32x20xf32, #tpu.memory_space<vmem>>, vector<32x20xf32>
    %c0_9 = arith.constant 0 : index
    %c0_10 = arith.constant 0 : index
    %18 = vector.load %arg2[%c0_9, %c0_10] : memref<128x20xf32, #tpu.memory_space<vmem>>, vector<128x20xf32>
    %cst_11 = arith.constant dense<0.000000e+00> : vector<32x128xf32>
    %19 = tpu.matmul %17, %18, %cst_11 {dimension_numbers = #tpu.dot_dimension_numbers<[1], [1], [0], [0], [0, 0, 1, 0], [], []>} : vector<32x20xf32>, vector<128x20xf32>, vector<32x128xf32> -> vector<32x128xf32>
    %20 = arith.addf %16, %19 : vector<32x128xf32>
    %c0_12 = arith.constant 0 : index
    %c0_13 = arith.constant 0 : index
    %21 = vector.load %arg6[%c0_12, %c0_13] : memref<32x1xf32, #tpu.memory_space<vmem>>, vector<32x1xf32>
    %22 = vector.broadcast %21 : vector<32x1xf32> to vector<32x128xf32>
    %23 = arith.addf %20, %22 : vector<32x128xf32>
    %cst_14 = arith.constant 0.000000e+00 : f32
    %24 = vector.broadcast %cst_14 : f32 to vector<32x128xf32>
    %25 = arith.maximumf %23, %24 : vector<32x128xf32>
    %c0_15 = arith.constant 0 : index
    %c0_16 = arith.constant 0 : index
    %26 = vector.load %arg7[%c0_15, %c0_16] : memref<32x32xf32, #tpu.memory_space<vmem>>, vector<32x32xf32>
    %cst_17 = arith.constant dense<0.000000e+00> : vector<32x128xf32>
    %27 = tpu.matmul %26, %25, %cst_17 {dimension_numbers = #tpu.dot_dimension_numbers<[1], [0], [0], [1], [0, 0, 1, 1], [], []>} : vector<32x32xf32>, vector<32x128xf32>, vector<32x128xf32> -> vector<32x128xf32>
    %c0_18 = arith.constant 0 : index
    %c0_19 = arith.constant 0 : index
    %28 = vector.load %arg8[%c0_18, %c0_19] : memref<32x1xf32, #tpu.memory_space<vmem>>, vector<32x1xf32>
    %29 = vector.broadcast %28 : vector<32x1xf32> to vector<32x128xf32>
    %30 = arith.addf %27, %29 : vector<32x128xf32>
    %cst_20 = arith.constant 0.000000e+00 : f32
    %31 = vector.broadcast %cst_20 : f32 to vector<32x128xf32>
    %32 = arith.maximumf %30, %31 : vector<32x128xf32>
    %c0_21 = arith.constant 0 : index
    %c0_22 = arith.constant 0 : index
    %33 = vector.load %arg9[%c0_21, %c0_22] : memref<32x32xf32, #tpu.memory_space<vmem>>, vector<32x32xf32>
    %cst_23 = arith.constant dense<0.000000e+00> : vector<32x128xf32>
    %34 = tpu.matmul %33, %32, %cst_23 {dimension_numbers = #tpu.dot_dimension_numbers<[1], [0], [0], [1], [0, 0, 1, 1], [], []>} : vector<32x32xf32>, vector<32x128xf32>, vector<32x128xf32> -> vector<32x128xf32>
    %c0_24 = arith.constant 0 : index
    %c0_25 = arith.constant 0 : index
    %35 = vector.load %arg10[%c0_24, %c0_25] : memref<32x1xf32, #tpu.memory_space<vmem>>, vector<32x1xf32>
    %36 = vector.broadcast %35 : vector<32x1xf32> to vector<32x128xf32>
    %37 = arith.addf %34, %36 : vector<32x128xf32>
    %cst_26 = arith.constant 0.000000e+00 : f32
    %38 = vector.broadcast %cst_26 : f32 to vector<32x128xf32>
    %39 = arith.maximumf %37, %38 : vector<32x128xf32>
    %c0_27 = arith.constant 0 : index
    %c0_28 = arith.constant 0 : index
    %40 = vector.load %arg11[%c0_27, %c0_28] : memref<32x32xf32, #tpu.memory_space<vmem>>, vector<32x32xf32>
    %cst_29 = arith.constant dense<0.000000e+00> : vector<32x128xf32>
    %41 = tpu.matmul %40, %39, %cst_29 {dimension_numbers = #tpu.dot_dimension_numbers<[1], [0], [0], [1], [0, 0, 1, 1], [], []>} : vector<32x32xf32>, vector<32x128xf32>, vector<32x128xf32> -> vector<32x128xf32>
    %c0_30 = arith.constant 0 : index
    %c0_31 = arith.constant 0 : index
    %42 = vector.load %arg12[%c0_30, %c0_31] : memref<32x1xf32, #tpu.memory_space<vmem>>, vector<32x1xf32>
    %43 = vector.broadcast %42 : vector<32x1xf32> to vector<32x128xf32>
    %44 = arith.addf %41, %43 : vector<32x128xf32>
    %cst_32 = arith.constant 0.000000e+00 : f32
    %45 = vector.broadcast %cst_32 : f32 to vector<32x128xf32>
    %46 = arith.maximumf %44, %45 : vector<32x128xf32>
    %c0_33 = arith.constant 0 : index
    %c0_34 = arith.constant 0 : index
    %47 = vector.load %arg13[%c0_33, %c0_34] : memref<8x32xf32, #tpu.memory_space<vmem>>, vector<8x32xf32>
    %cst_35 = arith.constant dense<0.000000e+00> : vector<8x128xf32>
    %48 = tpu.matmul %47, %46, %cst_35 {dimension_numbers = #tpu.dot_dimension_numbers<[1], [0], [0], [1], [0, 0, 1, 1], [], []>} : vector<8x32xf32>, vector<32x128xf32>, vector<8x128xf32> -> vector<8x128xf32>
    %c0_36 = arith.constant 0 : index
    %c0_37 = arith.constant 0 : index
    %49 = vector.load %arg14[%c0_36, %c0_37] : memref<8x1xf32, #tpu.memory_space<vmem>>, vector<8x1xf32>
    %50 = vector.broadcast %49 : vector<8x1xf32> to vector<8x128xf32>
    %51 = arith.addf %48, %50 : vector<8x128xf32>
    %c0_38 = arith.constant 0 : index
    %c0_39 = arith.constant 0 : index
    %52 = vector.load %arg15[%c0_38, %c0_39] : memref<8x128xf32, #tpu.memory_space<vmem>>, vector<8x128xf32>
    tpu.vector_store %arg15[%c0_38, %c0_39], %51 {strides = array<i32>} : memref<8x128xf32, #tpu.memory_space<vmem>>, vector<8x128xf32>,
    return
  }
  func.func @transform_0(%arg0: i32) -> (i32, i32) {
    %c0_i32 = arith.constant 0 : i32
    %c0_i32_0 = arith.constant 0 : i32
    return %c0_i32, %arg0 : i32, i32
  }
  func.func @transform_1(%arg0: i32) -> (i32, i32) {
    %c0_i32 = arith.constant 0 : i32
    %c0_i32_0 = arith.constant 0 : i32
    return %arg0, %c0_i32 : i32, i32
  }
  func.func @transform_2(%arg0: i32) -> (i32, i32) {
    %c0_i32 = arith.constant 0 : i32
    %c0_i32_0 = arith.constant 0 : i32
    %c0_i32_1 = arith.constant 0 : i32
    return %c0_i32, %c0_i32_0 : i32, i32
  }
  func.func @transform_3(%arg0: i32) -> (i32, i32) {
    %c0_i32 = arith.constant 0 : i32
    %c0_i32_0 = arith.constant 0 : i32
    %c0_i32_1 = arith.constant 0 : i32
    return %c0_i32, %c0_i32_0 : i32, i32
  }
  func.func @transform_4(%arg0: i32) -> (i32, i32) {
    %c0_i32 = arith.constant 0 : i32
    %c0_i32_0 = arith.constant 0 : i32
    %c0_i32_1 = arith.constant 0 : i32
    return %c0_i32, %c0_i32_0 : i32, i32
  }
  func.func @transform_5(%arg0: i32) -> (i32, i32) {
    %c0_i32 = arith.constant 0 : i32
    %c0_i32_0 = arith.constant 0 : i32
    %c0_i32_1 = arith.constant 0 : i32
    return %c0_i32, %c0_i32_0 : i32, i32
  }
  func.func @transform_6(%arg0: i32) -> (i32, i32) {
    %c0_i32 = arith.constant 0 : i32
    %c0_i32_0 = arith.constant 0 : i32
    %c0_i32_1 = arith.constant 0 : i32
    return %c0_i32, %c0_i32_0 : i32, i32
  }
  func.func @transform_7(%arg0: i32) -> (i32, i32) {
    %c0_i32 = arith.constant 0 : i32
    %c0_i32_0 = arith.constant 0 : i32
    %c0_i32_1 = arith.constant 0 : i32
    return %c0_i32, %c0_i32_0 : i32, i32
  }
  func.func @transform_8(%arg0: i32) -> (i32, i32) {
    %c0_i32 = arith.constant 0 : i32
    %c0_i32_0 = arith.constant 0 : i32
    %c0_i32_1 = arith.constant 0 : i32
    return %c0_i32, %c0_i32_0 : i32, i32
  }
  func.func @transform_9(%arg0: i32) -> (i32, i32) {
    %c0_i32 = arith.constant 0 : i32
    %c0_i32_0 = arith.constant 0 : i32
    %c0_i32_1 = arith.constant 0 : i32
    return %c0_i32, %c0_i32_0 : i32, i32
  }
  func.func @transform_10(%arg0: i32) -> (i32, i32) {
    %c0_i32 = arith.constant 0 : i32
    %c0_i32_0 = arith.constant 0 : i32
    %c0_i32_1 = arith.constant 0 : i32
    return %c0_i32, %c0_i32_0 : i32, i32
  }
  func.func @transform_11(%arg0: i32) -> (i32, i32) {
    %c0_i32 = arith.constant 0 : i32
    %c0_i32_0 = arith.constant 0 : i32
    %c0_i32_1 = arith.constant 0 : i32
    return %c0_i32, %c0_i32_0 : i32, i32
  }
  func.func @transform_12(%arg0: i32) -> (i32, i32) {
    %c0_i32 = arith.constant 0 : i32
    %c0_i32_0 = arith.constant 0 : i32
    %c0_i32_1 = arith.constant 0 : i32
    return %c0_i32, %c0_i32_0 : i32, i32
  }
  func.func @transform_13(%arg0: i32) -> (i32, i32) {
    %c0_i32 = arith.constant 0 : i32
    %c0_i32_0 = arith.constant 0 : i32
    %c0_i32_1 = arith.constant 0 : i32
    return %c0_i32, %c0_i32_0 : i32, i32
  }
  func.func @transform_14(%arg0: i32) -> (i32, i32) {
    %c0_i32 = arith.constant 0 : i32
    %c0_i32_0 = arith.constant 0 : i32
    return %c0_i32, %arg0 : i32, i32
  }
}

</mosaic_0001>

<llo_original>
// kernel: tpu_custom_call.1
$region0: #{tpu_custom_call.1}
  #allocation0 [shape = 'u32[]', space=smem, size = 0x4, offset = 0x4, fixed_abs, tag = 'smem constant byte address 0x4 - core index']
  #allocation1 [shape = 'u32[144,128]{1,0:T(1,128)}', space=vmem, size = 0x12000, scoped, tag = 'internal scratch']
  %s0 = inlined_call_operand.vmem [shape: s32[2,128], index: 0, kind: input, shape index: {}]
  %s1 = inlined_call_operand.vmem [shape: f32[128,20], index: 1, kind: input, shape index: {}]
  %s2 = inlined_call_operand.vmem [shape: f32[32,16], index: 2, kind: input, shape index: {}]
  %s3 = inlined_call_operand.vmem [shape: f32[32,8], index: 3, kind: input, shape index: {}]
  %s4 = inlined_call_operand.vmem [shape: f32[32,20], index: 4, kind: input, shape index: {}]
  %s5 = inlined_call_operand.vmem [shape: f32[32,1], index: 5, kind: input, shape index: {}]
  %s6 = inlined_call_operand.vmem [shape: f32[32,32], index: 6, kind: input, shape index: {}]
  %s7 = inlined_call_operand.vmem [shape: f32[32,1], index: 7, kind: input, shape index: {}]
  %s8 = inlined_call_operand.vmem [shape: f32[32,32], index: 8, kind: input, shape index: {}]
  %s9 = inlined_call_operand.vmem [shape: f32[32,1], index: 9, kind: input, shape index: {}]
  %s10 = inlined_call_operand.vmem [shape: f32[32,32], index: 10, kind: input, shape index: {}]
  %s11 = inlined_call_operand.vmem [shape: f32[32,1], index: 11, kind: input, shape index: {}]
  %s12 = inlined_call_operand.vmem [shape: f32[8,32], index: 12, kind: input, shape index: {}]
  %s13 = inlined_call_operand.vmem [shape: f32[8,1], index: 13, kind: input, shape index: {}]
  %s14 = inlined_call_operand.hbm [shape: f32[8,128], index: 14, kind: output, shape index: {}]
  %s15 = sld [smem:[#allocation0]]
  $region66: #{tpu_custom_call.1} parent=0
    _
  %s17 = ssub.s32 1, %s15
  %s18 = scalar_select 0, %s17, %s15
  $region1: #{tpu_custom_call.1} parent=0
    #allocation2 [shape = 'u8[4096]{0}', space=vmem, size = 0x1000, scoped, tag = 'output window, operand 0, single buffered']
    #allocation3 [shape = 's32[1]{0}', space=sflag, size = 0x4, scoped, tag = 'scoped memory for tpu_custom_call.1']
    %19 = vsyncpa [#allocation3], 0
    // Predicated region
    $region2: #{tpu_custom_call.1} parent=1 // pred_check
      _
    $region3: #{tpu_custom_call.1} parent=1 // pred_check_branch
      %21 = sbr.rel (0) target = $region5
    $region4: #{tpu_custom_call.1} parent=1 // pred_region
      _
    $region5: #{tpu_custom_call.1} parent=1 // pred_fallthru
      _
    // Predicated region
    $region6: #{tpu_custom_call.1} parent=1 // pred_check
      _
    $region7: #{tpu_custom_call.1} parent=1 // pred_check_branch
      %23 = sbr.rel (0) target = $region9
    $region8: #{tpu_custom_call.1} parent=1 // pred_region
      _
    $region9: #{tpu_custom_call.1} parent=1 // pred_fallthru
      _
    // Predicated region
    $region10: #{tpu_custom_call.1} parent=1 // pred_check
      _
    $region11: #{tpu_custom_call.1} parent=1 // pred_check_branch
      %25 = sbr.rel (0) target = $region13
    $region12: #{tpu_custom_call.1} parent=1 // pred_region
      _
    $region13: #{tpu_custom_call.1} parent=1 // pred_fallthru
      _
    // Predicated region
    $region14: #{tpu_custom_call.1} parent=1 // pred_check
      _
    $region15: #{tpu_custom_call.1} parent=1 // pred_check_branch
      %27 = sbr.rel (0) target = $region17
    $region16: #{tpu_custom_call.1} parent=1 // pred_region
      _
    $region17: #{tpu_custom_call.1} parent=1 // pred_fallthru
      _
    // Predicated region
    $region18: #{tpu_custom_call.1} parent=1 // pred_check
      _
    $region19: #{tpu_custom_call.1} parent=1 // pred_check_branch
      %29 = sbr.rel (0) target = $region21
    $region20: #{tpu_custom_call.1} parent=1 // pred_region
      _
    $region21: #{tpu_custom_call.1} parent=1 // pred_fallthru
      _
    // Predicated region
    $region22: #{tpu_custom_call.1} parent=1 // pred_check
      _
    $region23: #{tpu_custom_call.1} parent=1 // pred_check_branch
      %31 = sbr.rel (0) target = $region25
    $region24: #{tpu_custom_call.1} parent=1 // pred_region
      _
    $region25: #{tpu_custom_call.1} parent=1 // pred_fallthru
      _
    // Predicated region
    $region26: #{tpu_custom_call.1} parent=1 // pred_check
      _
    $region27: #{tpu_custom_call.1} parent=1 // pred_check_branch
      %33 = sbr.rel (0) target = $region29
    $region28: #{tpu_custom_call.1} parent=1 // pred_region
      _
    $region29: #{tpu_custom_call.1} parent=1 // pred_fallthru
      _
    // Predicated region
    $region30: #{tpu_custom_call.1} parent=1 // pred_check
      _
    $region31: #{tpu_custom_call.1} parent=1 // pred_check_branch
      %35 = sbr.rel (0) target = $region33
    $region32: #{tpu_custom_call.1} parent=1 // pred_region
      _
    $region33: #{tpu_custom_call.1} parent=1 // pred_fallthru
      _
    // Predicated region
    $region34: #{tpu_custom_call.1} parent=1 // pred_check
      _
    $region35: #{tpu_custom_call.1} parent=1 // pred_check_branch
      %37 = sbr.rel (0) target = $region37
    $region36: #{tpu_custom_call.1} parent=1 // pred_region
      _
    $region37: #{tpu_custom_call.1} parent=1 // pred_fallthru
      _
    // Predicated region
    $region38: #{tpu_custom_call.1} parent=1 // pred_check
      _
    $region39: #{tpu_custom_call.1} parent=1 // pred_check_branch
      %39 = sbr.rel (0) target = $region41
    $region40: #{tpu_custom_call.1} parent=1 // pred_region
      _
    $region41: #{tpu_custom_call.1} parent=1 // pred_fallthru
      _
    // Predicated region
    $region42: #{tpu_custom_call.1} parent=1 // pred_check
      _
    $region43: #{tpu_custom_call.1} parent=1 // pred_check_branch
      %41 = sbr.rel (0) target = $region45
    $region44: #{tpu_custom_call.1} parent=1 // pred_region
      _
    $region45: #{tpu_custom_call.1} parent=1 // pred_fallthru
      _
    // Predicated region
    $region46: #{tpu_custom_call.1} parent=1 // pred_check
      _
    $region47: #{tpu_custom_call.1} parent=1 // pred_check_branch
      %43 = sbr.rel (0) target = $region49
    $region48: #{tpu_custom_call.1} parent=1 // pred_region
      _
    $region49: #{tpu_custom_call.1} parent=1 // pred_fallthru
      _
    // Predicated region
    $region50: #{tpu_custom_call.1} parent=1 // pred_check
      _
    $region51: #{tpu_custom_call.1} parent=1 // pred_check_branch
      %45 = sbr.rel (0) target = $region53
    $region52: #{tpu_custom_call.1} parent=1 // pred_region
      _
    $region53: #{tpu_custom_call.1} parent=1 // pred_fallthru
      _
    // Predicated region
    $region54: #{tpu_custom_call.1} parent=1 // pred_check
      _
    $region55: #{tpu_custom_call.1} parent=1 // pred_check_branch
      %47 = sbr.rel (0) target = $region57
    $region56: #{tpu_custom_call.1} parent=1 // pred_region
      _
    $region57: #{tpu_custom_call.1} parent=1 // pred_fallthru
      _
    %v48 = vld [vmem:[%s0] sm:$0x1]
    %v49 = vld [vmem:[%s0 + $0x1] sm:$0x1]
    %v50 = vlaneseq
    %v51 = vshrl.u32 %v50, 7
    %v52 = vadd.s32 %v51, 8
    %v53 = vlaneseq
    %v54 = vshrl.u32 %v53, 7
    %v55 = vsub.s32 0, %v54
    %v56 = vrot.slane %v48, %v55
    %vm57 = vcmp.eq.s32.totalorder %v51, %v56
    %vm58 = vcmp.eq.s32.totalorder %v52, %v56
    %v59 = vsel %vm57, 1, 0
    %v60 = vsel %vm58, 1, 0
    %v61 = vcvt.s32.f32 %v59
    %v62 = vcvt.s32.f32 %v60
    %v63 = vlaneseq
    %v64 = vshrl.u32 %v63, 7
    %v65 = vsub.s32 0, %v64
    %v66 = vrot.slane %v49, %v65
    %vm67 = vcmp.eq.s32.totalorder %v51, %v66
    %v68 = vsel %vm67, 1, 0
    %v69 = vcvt.s32.f32 %v68
    %v70 = vld [vmem:[%s2] sm:$0xff]
    %v71 = vld [vmem:[%s2 + $0x8] sm:$0xff]
    %v72 = vld [vmem:[%s2 + $0x10] sm:$0xff]
    %v73 = vld [vmem:[%s2 + $0x18] sm:$0xff]
    %v74 = vld [vmem:[%s3] sm:$0xff]
    %v75 = vld [vmem:[%s3 + $0x8] sm:$0xff]
    %v76 = vld [vmem:[%s3 + $0x10] sm:$0xff]
    %v77 = vld [vmem:[%s3 + $0x18] sm:$0xff]
    %vm78 = vcmask 64512
    %v80 = vsel %vm78, %v74, 0
    %v83 = vsel %vm78, %v75, 0
    %v86 = vsel %vm78, %v76, 0
    %v89 = vsel %vm78, %v77, 0
    %91 = vmatprep.subr.mxu0 0.0
    %92 = vmatpush1.msra.mxu0 0.0
    %93 = vmatprep.subr.mxu0 0.0
    %94 = vmatpush1.msra.mxu0 0.0
    %95 = vmatprep.subr.mxu0 0.0
    %96 = vmatpush1.msra.mxu0 0.0
    %97 = vmatprep.subr.mxu0 0.0
    %98 = vmatpush1.msra.mxu0 0.0
    %99 = vmatprep.subr.mxu0 0.0
    %100 = vmatpush1.msra.mxu0 0.0
    %101 = vmatprep.subr.mxu0 0.0
    %102 = vmatpush1.msra.mxu0 0.0
    %103 = vmatprep.subr.mxu0 0.0
    %104 = vmatpush1.msra.mxu0 0.0
    %105 = vmatprep.subr.mxu0 0.0
    %106 = vmatpush1.msra.mxu0 0.0
    %107 = vmatprep.subr.mxu0 0.0
    %108 = vmatpush1.msra.mxu0 0.0
    %109 = vmatprep.subr.mxu0 0.0
    %110 = vmatpush1.msra.mxu0 0.0
    %111 = vmatprep.subr.mxu0 0.0
    %112 = vmatpush1.msra.mxu0 0.0
    %113 = vmatprep.subr.mxu0 0.0
    %114 = vmatpush1.msra.mxu0 0.0
    %115 = vmatprep.subr.mxu0 0.0
    %116 = vmatpush1.msra.mxu0 0.0
    %117 = vmatprep.subr.mxu0 0.0
    %118 = vmatpush1.msra.mxu0 0.0
    %119 = vmatprep.subr.mxu0 0.0
    %120 = vmatpush1.msra.mxu0 0.0
    %121 = vmatprep.subr.mxu0 0.0
    %122 = vmatpush1.msra.mxu0 %v69
    %123 = vmatprep.subr.mxu0 0.0
    %124 = vmatpush2.msra.mxu0 0.0
    %125 = vmatprep.subr.mxu0 0.0
    %126 = vmatpush2.msra.mxu0 0.0
    %127 = vmatprep.subr.mxu0 0.0
    %128 = vmatpush2.msra.mxu0 0.0
    %129 = vmatprep.subr.mxu0 0.0
    %130 = vmatpush2.msra.mxu0 0.0
    %131 = vmatprep.subr.mxu0 0.0
    %132 = vmatpush2.msra.mxu0 0.0
    %133 = vmatprep.subr.mxu0 0.0
    %134 = vmatpush2.msra.mxu0 0.0
    %135 = vmatprep.subr.mxu0 0.0
    %136 = vmatpush2.msra.mxu0 0.0
    %137 = vmatprep.subr.mxu0 0.0
    %138 = vmatpush2.msra.mxu0 0.0
    %139 = vmatprep.subr.mxu0 0.0
    %140 = vmatpush2.msra.mxu0 0.0
    %141 = vmatprep.subr.mxu0 0.0
    %142 = vmatpush2.msra.mxu0 0.0
    %143 = vmatprep.subr.mxu0 0.0
    %144 = vmatpush2.msra.mxu0 0.0
    %145 = vmatprep.subr.mxu0 0.0
    %146 = vmatpush2.msra.mxu0 0.0
    %147 = vmatprep.subr.mxu0 0.0
    %148 = vmatpush2.msra.mxu0 0.0
    %149 = vmatprep.subr.mxu0 0.0
    %150 = vmatpush2.msra.mxu0 0.0
    %151 = vmatprep.subr.mxu0 0.0
    %152 = vmatpush2.msra.mxu0 0.0
    %153 = vmatprep.subr.mxu0 0.0
    %154 = vmatpush2.msra.mxu0 0.0
    %155 = vmatprep.mubr.f32.mxu0 0.0
    %156 = vmatmul.mubr.f32.gmra.mxu0 %v80
    %v157 = vpop.f32.mrf.mxu0
    %v158 = vadd.f32 0.0, %v157
    %v159 = vpop.f32.mrf.mxu0
    %160 = vmatprep.mubr.f32.mxu0 0.0
    %161 = vmatmul.mubr.f32.gmra.mxu0 %v83
    %v162 = vpop.f32.mrf.mxu0
    %v163 = vadd.f32 0.0, %v162
    %v164 = vpop.f32.mrf.mxu0
    %165 = vmatprep.mubr.f32.mxu0 0.0
    %166 = vmatmul.mubr.f32.gmra.mxu0 %v86
    %v167 = vpop.f32.mrf.mxu0
    %v168 = vadd.f32 0.0, %v167
    %v169 = vpop.f32.mrf.mxu0
    %170 = vmatprep.mubr.f32.mxu0 0.0
    %171 = vmatmul.mubr.f32.gmra.mxu0 %v89
    %v172 = vpop.f32.mrf.mxu0
    %v173 = vadd.f32 0.0, %v172
    %v174 = vpop.f32.mrf.mxu0
    %175 = vdwg.mxu0
    %vm176 = vcmask 130048
    %v178 = vsel %vm176, %v70, 0
    %v181 = vsel %vm176, %v71, 0
    %v184 = vsel %vm176, %v72, 0
    %v187 = vsel %vm176, %v73, 0
    %189 = vmatprep.subr.mxu0 0.0
    %190 = vmatpush1.msra.mxu0 0.0
    %191 = vmatprep.subr.mxu0 0.0
    %192 = vmatpush1.msra.mxu0 0.0
    %193 = vmatprep.subr.mxu0 0.0
    %194 = vmatpush1.msra.mxu0 0.0
    %195 = vmatprep.subr.mxu0 0.0
    %196 = vmatpush1.msra.mxu0 0.0
    %197 = vmatprep.subr.mxu0 0.0
    %198 = vmatpush1.msra.mxu0 0.0
    %199 = vmatprep.subr.mxu0 0.0
    %200 = vmatpush1.msra.mxu0 0.0
    %201 = vmatprep.subr.mxu0 0.0
    %202 = vmatpush1.msra.mxu0 0.0
    %203 = vmatprep.subr.mxu0 0.0
    %204 = vmatpush1.msra.mxu0 0.0
    %205 = vmatprep.subr.mxu0 0.0
    %206 = vmatpush1.msra.mxu0 0.0
    %207 = vmatprep.subr.mxu0 0.0
    %208 = vmatpush1.msra.mxu0 0.0
    %209 = vmatprep.subr.mxu0 0.0
    %210 = vmatpush1.msra.mxu0 0.0
    %211 = vmatprep.subr.mxu0 0.0
    %212 = vmatpush1.msra.mxu0 0.0
    %213 = vmatprep.subr.mxu0 0.0
    %214 = vmatpush1.msra.mxu0 0.0
    %215 = vmatprep.subr.mxu0 0.0
    %216 = vmatpush1.msra.mxu0 0.0
    %217 = vmatprep.subr.mxu0 0.0
    %218 = vmatpush1.msra.mxu0 %v62
    %219 = vmatprep.subr.mxu0 0.0
    %220 = vmatpush1.msra.mxu0 %v61
    %221 = vmatprep.subr.mxu0 0.0
    %222 = vmatpush2.msra.mxu0 0.0
    %223 = vmatprep.subr.mxu0 0.0
    %224 = vmatpush2.msra.mxu0 0.0
    %225 = vmatprep.subr.mxu0 0.0
    %226 = vmatpush2.msra.mxu0 0.0
    %227 = vmatprep.subr.mxu0 0.0
    %228 = vmatpush2.msra.mxu0 0.0
    %229 = vmatprep.subr.mxu0 0.0
    %230 = vmatpush2.msra.mxu0 0.0
    %231 = vmatprep.subr.mxu0 0.0
    %232 = vmatpush2.msra.mxu0 0.0
    %233 = vmatprep.subr.mxu0 0.0
    %234 = vmatpush2.msra.mxu0 0.0
    %235 = vmatprep.subr.mxu0 0.0
    %236 = vmatpush2.msra.mxu0 0.0
    %237 = vmatprep.subr.mxu0 0.0
    %238 = vmatpush2.msra.mxu0 0.0
    %239 = vmatprep.subr.mxu0 0.0
    %240 = vmatpush2.msra.mxu0 0.0
    %241 = vmatprep.subr.mxu0 0.0
    %242 = vmatpush2.msra.mxu0 0.0
    %243 = vmatprep.subr.mxu0 0.0
    %244 = vmatpush2.msra.mxu0 0.0
    %245 = vmatprep.subr.mxu0 0.0
    %246 = vmatpush2.msra.mxu0 0.0
    %247 = vmatprep.subr.mxu0 0.0
    %248 = vmatpush2.msra.mxu0 0.0
    %249 = vmatprep.subr.mxu0 0.0
    %250 = vmatpush2.msra.mxu0 0.0
    %251 = vmatprep.subr.mxu0 0.0
    %252 = vmatpush2.msra.mxu0 0.0
    %253 = vmatprep.mubr.f32.mxu0 0.0
    %254 = vmatmul.mubr.f32.gmra.mxu0 %v178
    %v255 = vpop.f32.mrf.mxu0
    %v256 = vadd.f32 %v158, %v255
    %v257 = vpop.f32.mrf.mxu0
    %258 = vmatprep.mubr.f32.mxu0 0.0
    %259 = vmatmul.mubr.f32.gmra.mxu0 %v181
    %v260 = vpop.f32.mrf.mxu0
    %v261 = vadd.f32 %v163, %v260
    %v262 = vpop.f32.mrf.mxu0
    %263 = vmatprep.mubr.f32.mxu0 0.0
    %264 = vmatmul.mubr.f32.gmra.mxu0 %v184
    %v265 = vpop.f32.mrf.mxu0
    %v266 = vadd.f32 %v168, %v265
    %v267 = vpop.f32.mrf.mxu0
    %268 = vmatprep.mubr.f32.mxu0 0.0
    %269 = vmatmul.mubr.f32.gmra.mxu0 %v187
    %v270 = vpop.f32.mrf.mxu0
    %v271 = vadd.f32 %v173, %v270
    %v272 = vpop.f32.mrf.mxu0
    %273 = vdwg.mxu0
    %v274 = vld [vmem:[%s4] sm:$0xff]
    %v275 = vld [vmem:[%s4 + $0x8] sm:$0xff]
    %v276 = vld [vmem:[%s4 + $0x10] sm:$0xff]
    %v277 = vld [vmem:[%s4 + $0x18] sm:$0xff]
    %v278 = vld [vmem:[%s1] sm:$0xff]
    %v279 = vld [vmem:[%s1 + $0x8] sm:$0xff]
    %v280 = vld [vmem:[%s1 + $0x10] sm:$0xff]
    %v281 = vld [vmem:[%s1 + $0x18] sm:$0xff]
    %v282 = vld [vmem:[%s1 + $0x20] sm:$0xff]
    %v283 = vld [vmem:[%s1 + $0x28] sm:$0xff]
    %v284 = vld [vmem:[%s1 + $0x30] sm:$0xff]
    %v285 = vld [vmem:[%s1 + $0x38] sm:$0xff]
    %v286 = vld [vmem:[%s1 + $0x40] sm:$0xff]
    %v287 = vld [vmem:[%s1 + $0x48] sm:$0xff]
    %v288 = vld [vmem:[%s1 + $0x50] sm:$0xff]
    %v289 = vld [vmem:[%s1 + $0x58] sm:$0xff]
    %v290 = vld [vmem:[%s1 + $0x60] sm:$0xff]
    %v291 = vld [vmem:[%s1 + $0x68] sm:$0xff]
    %v292 = vld [vmem:[%s1 + $0x70] sm:$0xff]
    %v293 = vld [vmem:[%s1 + $0x78] sm:$0xff]
    %vm294 = vcmask 162816
    %v296 = vsel %vm294, %v274, 0
    %v299 = vsel %vm294, %v275, 0
    %v302 = vsel %vm294, %v276, 0
    %v305 = vsel %vm294, %v277, 0
    %v308 = vsel %vm294, %v278, 0
    %v311 = vsel %vm294, %v279, 0
    %v314 = vsel %vm294, %v280, 0
    %v317 = vsel %vm294, %v281, 0
    %v320 = vsel %vm294, %v282, 0
    %v323 = vsel %vm294, %v283, 0
    %v326 = vsel %vm294, %v284, 0
    %v329 = vsel %vm294, %v285, 0
    %v332 = vsel %vm294, %v286, 0
    %v335 = vsel %vm294, %v287, 0
    %v338 = vsel %vm294, %v288, 0
    %v341 = vsel %vm294, %v289, 0
    %v344 = vsel %vm294, %v290, 0
    %v347 = vsel %vm294, %v291, 0
    %v350 = vsel %vm294, %v292, 0
    %v353 = vsel %vm294, %v293, 0
    %355 = vmatprep.subr.mxu0 0.0
    %356 = vmatpush1.xpose.msra.mxu0 %v353
    %357 = vmatprep.subr.mxu0 0.0
    %358 = vmatpush1.xpose.msra.mxu0 %v350
    %359 = vmatprep.subr.mxu0 0.0
    %360 = vmatpush1.xpose.msra.mxu0 %v347
    %361 = vmatprep.subr.mxu0 0.0
    %362 = vmatpush1.xpose.msra.mxu0 %v344
    %363 = vmatprep.subr.mxu0 0.0
    %364 = vmatpush1.xpose.msra.mxu0 %v341
    %365 = vmatprep.subr.mxu0 0.0
    %366 = vmatpush1.xpose.msra.mxu0 %v338
    %367 = vmatprep.subr.mxu0 0.0
    %368 = vmatpush1.xpose.msra.mxu0 %v335
    %369 = vmatprep.subr.mxu0 0.0
    %370 = vmatpush1.xpose.msra.mxu0 %v332
    %371 = vmatprep.subr.mxu0 0.0
    %372 = vmatpush1.xpose.msra.mxu0 %v329
    %373 = vmatprep.subr.mxu0 0.0
    %374 = vmatpush1.xpose.msra.mxu0 %v326
    %375 = vmatprep.subr.mxu0 0.0
    %376 = vmatpush1.xpose.msra.mxu0 %v323
    %377 = vmatprep.subr.mxu0 0.0
    %378 = vmatpush1.xpose.msra.mxu0 %v320
    %379 = vmatprep.subr.mxu0 0.0
    %380 = vmatpush1.xpose.msra.mxu0 %v317
    %381 = vmatprep.subr.mxu0 0.0
    %382 = vmatpush1.xpose.msra.mxu0 %v314
    %383 = vmatprep.subr.mxu0 0.0
    %384 = vmatpush1.xpose.msra.mxu0 %v311
    %385 = vmatprep.subr.mxu0 0.0
    %386 = vmatpush1.xpose.msra.mxu0 %v308
    %387 = vmatprep.subr.mxu0 0.0
    %388 = vmatpush2.xpose.msra.mxu0 0.0
    %389 = vmatprep.subr.mxu0 0.0
    %390 = vmatpush2.xpose.msra.mxu0 0.0
    %391 = vmatprep.subr.mxu0 0.0
    %392 = vmatpush2.xpose.msra.mxu0 0.0
    %393 = vmatprep.subr.mxu0 0.0
    %394 = vmatpush2.xpose.msra.mxu0 0.0
    %395 = vmatprep.subr.mxu0 0.0
    %396 = vmatpush2.xpose.msra.mxu0 0.0
    %397 = vmatprep.subr.mxu0 0.0
    %398 = vmatpush2.xpose.msra.mxu0 0.0
    %399 = vmatprep.subr.mxu0 0.0
    %400 = vmatpush2.xpose.msra.mxu0 0.0
    %401 = vmatprep.subr.mxu0 0.0
    %402 = vmatpush2.xpose.msra.mxu0 0.0
    %403 = vmatprep.subr.mxu0 0.0
    %404 = vmatpush2.xpose.msra.mxu0 0.0
    %405 = vmatprep.subr.mxu0 0.0
    %406 = vmatpush2.xpose.msra.mxu0 0.0
    %407 = vmatprep.subr.mxu0 0.0
    %408 = vmatpush2.xpose.msra.mxu0 0.0
    %409 = vmatprep.subr.mxu0 0.0
    %410 = vmatpush2.xpose.msra.mxu0 0.0
    %411 = vmatprep.subr.mxu0 0.0
    %412 = vmatpush2.xpose.msra.mxu0 0.0
    %413 = vmatprep.subr.mxu0 0.0
    %414 = vmatpush2.xpose.msra.mxu0 0.0
    %415 = vmatprep.subr.mxu0 0.0
    %416 = vmatpush2.xpose.msra.mxu0 0.0
    %417 = vmatprep.subr.mxu0 0.0
    %418 = vmatpush2.xpose.msra.mxu0 0.0
    %419 = vmatprep.mubr.f32.mxu0 0.0
    %420 = vmatmul.mubr.f32.gmra.mxu0 %v296
    %v421 = vpop.f32.mrf.mxu0
    %v422 = vadd.f32 0.0, %v421
    %v423 = vpop.f32.mrf.mxu0
    %424 = vmatprep.mubr.f32.mxu0 0.0
    %425 = vmatmul.mubr.f32.gmra.mxu0 %v299
    %v426 = vpop.f32.mrf.mxu0
    %v427 = vadd.f32 0.0, %v426
    %v428 = vpop.f32.mrf.mxu0
    %429 = vmatprep.mubr.f32.mxu0 0.0
    %430 = vmatmul.mubr.f32.gmra.mxu0 %v302
    %v431 = vpop.f32.mrf.mxu0
    %v432 = vadd.f32 0.0, %v431
    %v433 = vpop.f32.mrf.mxu0
    %434 = vmatprep.mubr.f32.mxu0 0.0
    %435 = vmatmul.mubr.f32.gmra.mxu0 %v305
    %v436 = vpop.f32.mrf.mxu0
    %v437 = vadd.f32 0.0, %v436
    %v438 = vpop.f32.mrf.mxu0
    %439 = vdwg.mxu0
    %v440 = vadd.f32 %v256, %v422
    %v441 = vadd.f32 %v261, %v427
    %v442 = vadd.f32 %v266, %v432
    %v443 = vadd.f32 %v271, %v437
    %v444 = vld [vmem:[%s5] sm:$0xff]
    %v445 = vld [vmem:[%s5 + $0x8] sm:$0xff]
    %v446 = vld [vmem:[%s5 + $0x10] sm:$0xff]
    %v447 = vld [vmem:[%s5 + $0x18] sm:$0xff]
    %449 = vset.pattern.permute.xlu0 0
    %450 = vperm.xlu0 %449, %v444
    %v451 = vpop.permute.xlu0 %450
    %454 = vset.pattern.permute.xlu0 0
    %455 = vperm.xlu0 %454, %v445
    %v456 = vpop.permute.xlu0 %455
    %459 = vset.pattern.permute.xlu0 0
    %460 = vperm.xlu0 %459, %v446
    %v461 = vpop.permute.xlu0 %460
    %464 = vset.pattern.permute.xlu0 0
    %465 = vperm.xlu0 %464, %v447
    %v466 = vpop.permute.xlu0 %465
    %v468 = vadd.f32 %v440, %v451
    %v469 = vadd.f32 %v441, %v456
    %v470 = vadd.f32 %v442, %v461
    %v471 = vadd.f32 %v443, %v466
    %v472 = vmax.f32 %v468, 0.0
    %v473 = vmax.f32 %v469, 0.0
    %v474 = vmax.f32 %v470, 0.0
    %v475 = vmax.f32 %v471, 0.0
    %v476 = vld [vmem:[%s6] sm:$0xff]
    %v477 = vld [vmem:[%s6 + $0x8] sm:$0xff]
    %v478 = vld [vmem:[%s6 + $0x10] sm:$0xff]
    %v479 = vld [vmem:[%s6 + $0x18] sm:$0xff]
    %v480 = vld [vmem:[%s7] sm:$0xff]
    %v481 = vld [vmem:[%s7 + $0x8] sm:$0xff]
    %v482 = vld [vmem:[%s7 + $0x10] sm:$0xff]
    %v483 = vld [vmem:[%s7 + $0x18] sm:$0xff]
    %485 = vset.pattern.permute.xlu0 0
    %486 = vperm.xlu0 %485, %v480
    %v487 = vpop.permute.xlu0 %486
    %490 = vset.pattern.permute.xlu0 0
    %491 = vperm.xlu0 %490, %v481
    %v492 = vpop.permute.xlu0 %491
    %495 = vset.pattern.permute.xlu0 0
    %496 = vperm.xlu0 %495, %v482
    %v497 = vpop.permute.xlu0 %496
    %500 = vset.pattern.permute.xlu0 0
    %501 = vperm.xlu0 %500, %v483
    %v502 = vpop.permute.xlu0 %501
    %vm504 = vcmask 261120
    %v506 = vsel %vm504, %v476, 0
    %v509 = vsel %vm504, %v477, 0
    %v512 = vsel %vm504, %v478, 0
    %v515 = vsel %vm504, %v479, 0
    %517 = vmatprep.subr.mxu0 0.0
    %518 = vmatpush1.msra.mxu0 0.0
    %519 = vmatprep.subr.mxu0 0.0
    %520 = vmatpush1.msra.mxu0 0.0
    %521 = vmatprep.subr.mxu0 0.0
    %522 = vmatpush1.msra.mxu0 0.0
    %523 = vmatprep.subr.mxu0 0.0
    %524 = vmatpush1.msra.mxu0 0.0
    %525 = vmatprep.subr.mxu0 0.0
    %526 = vmatpush1.msra.mxu0 0.0
    %527 = vmatprep.subr.mxu0 0.0
    %528 = vmatpush1.msra.mxu0 0.0
    %529 = vmatprep.subr.mxu0 0.0
    %530 = vmatpush1.msra.mxu0 0.0
    %531 = vmatprep.subr.mxu0 0.0
    %532 = vmatpush1.msra.mxu0 0.0
    %533 = vmatprep.subr.mxu0 0.0
    %534 = vmatpush1.msra.mxu0 0.0
    %535 = vmatprep.subr.mxu0 0.0
    %536 = vmatpush1.msra.mxu0 0.0
    %537 = vmatprep.subr.mxu0 0.0
    %538 = vmatpush1.msra.mxu0 0.0
    %539 = vmatprep.subr.mxu0 0.0
    %540 = vmatpush1.msra.mxu0 0.0
    %541 = vmatprep.subr.mxu0 0.0
    %542 = vmatpush1.msra.mxu0 %v475
    %543 = vmatprep.subr.mxu0 0.0
    %544 = vmatpush1.msra.mxu0 %v474
    %545 = vmatprep.subr.mxu0 0.0
    %546 = vmatpush1.msra.mxu0 %v473
    %547 = vmatprep.subr.mxu0 0.0
    %548 = vmatpush1.msra.mxu0 %v472
    %549 = vmatprep.subr.mxu0 0.0
    %550 = vmatpush2.msra.mxu0 0.0
    %551 = vmatprep.subr.mxu0 0.0
    %552 = vmatpush2.msra.mxu0 0.0
    %553 = vmatprep.subr.mxu0 0.0
    %554 = vmatpush2.msra.mxu0 0.0
    %555 = vmatprep.subr.mxu0 0.0
    %556 = vmatpush2.msra.mxu0 0.0
    %557 = vmatprep.subr.mxu0 0.0
    %558 = vmatpush2.msra.mxu0 0.0
    %559 = vmatprep.subr.mxu0 0.0
    %560 = vmatpush2.msra.mxu0 0.0
    %561 = vmatprep.subr.mxu0 0.0
    %562 = vmatpush2.msra.mxu0 0.0
    %563 = vmatprep.subr.mxu0 0.0
    %564 = vmatpush2.msra.mxu0 0.0
    %565 = vmatprep.subr.mxu0 0.0
    %566 = vmatpush2.msra.mxu0 0.0
    %567 = vmatprep.subr.mxu0 0.0
    %568 = vmatpush2.msra.mxu0 0.0
    %569 = vmatprep.subr.mxu0 0.0
    %570 = vmatpush2.msra.mxu0 0.0
    %571 = vmatprep.subr.mxu0 0.0
    %572 = vmatpush2.msra.mxu0 0.0
    %573 = vmatprep.subr.mxu0 0.0
    %574 = vmatpush2.msra.mxu0 0.0
    %575 = vmatprep.subr.mxu0 0.0
    %576 = vmatpush2.msra.mxu0 0.0
    %577 = vmatprep.subr.mxu0 0.0
    %578 = vmatpush2.msra.mxu0 0.0
    %579 = vmatprep.subr.mxu0 0.0
    %580 = vmatpush2.msra.mxu0 0.0
    %581 = vmatprep.mubr.f32.mxu0 0.0
    %582 = vmatmul.mubr.f32.gmra.mxu0 %v506
    %v583 = vpop.f32.mrf.mxu0
    %v584 = vadd.f32 %v487, %v583
    %v585 = vpop.f32.mrf.mxu0
    %586 = vmatprep.mubr.f32.mxu0 0.0
    %587 = vmatmul.mubr.f32.gmra.mxu0 %v509
    %v588 = vpop.f32.mrf.mxu0
    %v589 = vadd.f32 %v492, %v588
    %v590 = vpop.f32.mrf.mxu0
    %591 = vmatprep.mubr.f32.mxu0 0.0
    %592 = vmatmul.mubr.f32.gmra.mxu0 %v512
    %v593 = vpop.f32.mrf.mxu0
    %v594 = vadd.f32 %v497, %v593
    %v595 = vpop.f32.mrf.mxu0
    %596 = vmatprep.mubr.f32.mxu0 0.0
    %597 = vmatmul.mubr.f32.gmra.mxu0 %v515
    %v598 = vpop.f32.mrf.mxu0
    %v599 = vadd.f32 %v502, %v598
    %v600 = vpop.f32.mrf.mxu0
    %601 = vdwg.mxu0
    %v602 = vmax.f32 %v584, 0.0
    %v603 = vmax.f32 %v589, 0.0
    %v604 = vmax.f32 %v594, 0.0
    %v605 = vmax.f32 %v599, 0.0
    %v606 = vld [vmem:[%s8] sm:$0xff]
    %v607 = vld [vmem:[%s8 + $0x8] sm:$0xff]
    %v608 = vld [vmem:[%s8 + $0x10] sm:$0xff]
    %v609 = vld [vmem:[%s8 + $0x18] sm:$0xff]
    %v610 = vld [vmem:[%s9] sm:$0xff]
    %v611 = vld [vmem:[%s9 + $0x8] sm:$0xff]
    %v612 = vld [vmem:[%s9 + $0x10] sm:$0xff]
    %v613 = vld [vmem:[%s9 + $0x18] sm:$0xff]
    %615 = vset.pattern.permute.xlu0 0
    %616 = vperm.xlu0 %615, %v610
    %v617 = vpop.permute.xlu0 %616
    %620 = vset.pattern.permute.xlu0 0
    %621 = vperm.xlu0 %620, %v611
    %v622 = vpop.permute.xlu0 %621
    %625 = vset.pattern.permute.xlu0 0
    %626 = vperm.xlu0 %625, %v612
    %v627 = vpop.permute.xlu0 %626
    %630 = vset.pattern.permute.xlu0 0
    %631 = vperm.xlu0 %630, %v613
    %v632 = vpop.permute.xlu0 %631
    %v635 = vsel %vm504, %v606, 0
    %v638 = vsel %vm504, %v607, 0
    %v641 = vsel %vm504, %v608, 0
    %v644 = vsel %vm504, %v609, 0
    %646 = vmatprep.subr.mxu0 0.0
    %647 = vmatpush1.msra.mxu0 0.0
    %648 = vmatprep.subr.mxu0 0.0
    %649 = vmatpush1.msra.mxu0 0.0
    %650 = vmatprep.subr.mxu0 0.0
    %651 = vmatpush1.msra.mxu0 0.0
    %652 = vmatprep.subr.mxu0 0.0
    %653 = vmatpush1.msra.mxu0 0.0
    %654 = vmatprep.subr.mxu0 0.0
    %655 = vmatpush1.msra.mxu0 0.0
    %656 = vmatprep.subr.mxu0 0.0
    %657 = vmatpush1.msra.mxu0 0.0
    %658 = vmatprep.subr.mxu0 0.0
    %659 = vmatpush1.msra.mxu0 0.0
    %660 = vmatprep.subr.mxu0 0.0
    %661 = vmatpush1.msra.mxu0 0.0
    %662 = vmatprep.subr.mxu0 0.0
    %663 = vmatpush1.msra.mxu0 0.0
    %664 = vmatprep.subr.mxu0 0.0
    %665 = vmatpush1.msra.mxu0 0.0
    %666 = vmatprep.subr.mxu0 0.0
    %667 = vmatpush1.msra.mxu0 0.0
    %668 = vmatprep.subr.mxu0 0.0
    %669 = vmatpush1.msra.mxu0 0.0
    %670 = vmatprep.subr.mxu0 0.0
    %671 = vmatpush1.msra.mxu0 %v605
    %672 = vmatprep.subr.mxu0 0.0
    %673 = vmatpush1.msra.mxu0 %v604
    %674 = vmatprep.subr.mxu0 0.0
    %675 = vmatpush1.msra.mxu0 %v603
    %676 = vmatprep.subr.mxu0 0.0
    %677 = vmatpush1.msra.mxu0 %v602
    %678 = vmatprep.subr.mxu0 0.0
    %679 = vmatpush2.msra.mxu0 0.0
    %680 = vmatprep.subr.mxu0 0.0
    %681 = vmatpush2.msra.mxu0 0.0
    %682 = vmatprep.subr.mxu0 0.0
    %683 = vmatpush2.msra.mxu0 0.0
    %684 = vmatprep.subr.mxu0 0.0
    %685 = vmatpush2.msra.mxu0 0.0
    %686 = vmatprep.subr.mxu0 0.0
    %687 = vmatpush2.msra.mxu0 0.0
    %688 = vmatprep.subr.mxu0 0.0
    %689 = vmatpush2.msra.mxu0 0.0
    %690 = vmatprep.subr.mxu0 0.0
    %691 = vmatpush2.msra.mxu0 0.0
    %692 = vmatprep.subr.mxu0 0.0
    %693 = vmatpush2.msra.mxu0 0.0
    %694 = vmatprep.subr.mxu0 0.0
    %695 = vmatpush2.msra.mxu0 0.0
    %696 = vmatprep.subr.mxu0 0.0
    %697 = vmatpush2.msra.mxu0 0.0
    %698 = vmatprep.subr.mxu0 0.0
    %699 = vmatpush2.msra.mxu0 0.0
    %700 = vmatprep.subr.mxu0 0.0
    %701 = vmatpush2.msra.mxu0 0.0
    %702 = vmatprep.subr.mxu0 0.0
    %703 = vmatpush2.msra.mxu0 0.0
    %704 = vmatprep.subr.mxu0 0.0
    %705 = vmatpush2.msra.mxu0 0.0
    %706 = vmatprep.subr.mxu0 0.0
    %707 = vmatpush2.msra.mxu0 0.0
    %708 = vmatprep.subr.mxu0 0.0
    %709 = vmatpush2.msra.mxu0 0.0
    %710 = vmatprep.mubr.f32.mxu0 0.0
    %711 = vmatmul.mubr.f32.gmra.mxu0 %v635
    %v712 = vpop.f32.mrf.mxu0
    %v713 = vadd.f32 %v617, %v712
    %v714 = vpop.f32.mrf.mxu0
    %715 = vmatprep.mubr.f32.mxu0 0.0
    %716 = vmatmul.mubr.f32.gmra.mxu0 %v638
    %v717 = vpop.f32.mrf.mxu0
    %v718 = vadd.f32 %v622, %v717
    %v719 = vpop.f32.mrf.mxu0
    %720 = vmatprep.mubr.f32.mxu0 0.0
    %721 = vmatmul.mubr.f32.gmra.mxu0 %v641
    %v722 = vpop.f32.mrf.mxu0
    %v723 = vadd.f32 %v627, %v722
    %v724 = vpop.f32.mrf.mxu0
    %725 = vmatprep.mubr.f32.mxu0 0.0
    %726 = vmatmul.mubr.f32.gmra.mxu0 %v644
    %v727 = vpop.f32.mrf.mxu0
    %v728 = vadd.f32 %v632, %v727
    %v729 = vpop.f32.mrf.mxu0
    %730 = vdwg.mxu0
    %v731 = vmax.f32 %v713, 0.0
    %v732 = vmax.f32 %v718, 0.0
    %v733 = vmax.f32 %v723, 0.0
    %v734 = vmax.f32 %v728, 0.0
    %v735 = vld [vmem:[%s10] sm:$0xff]
    %v736 = vld [vmem:[%s10 + $0x8] sm:$0xff]
    %v737 = vld [vmem:[%s10 + $0x10] sm:$0xff]
    %v738 = vld [vmem:[%s10 + $0x18] sm:$0xff]
    %v739 = vld [vmem:[%s11] sm:$0xff]
    %v740 = vld [vmem:[%s11 + $0x8] sm:$0xff]
    %v741 = vld [vmem:[%s11 + $0x10] sm:$0xff]
    %v742 = vld [vmem:[%s11 + $0x18] sm:$0xff]
    %744 = vset.pattern.permute.xlu0 0
    %745 = vperm.xlu0 %744, %v739
    %v746 = vpop.permute.xlu0 %745
    %749 = vset.pattern.permute.xlu0 0
    %750 = vperm.xlu0 %749, %v740
    %v751 = vpop.permute.xlu0 %750
    %754 = vset.pattern.permute.xlu0 0
    %755 = vperm.xlu0 %754, %v741
    %v756 = vpop.permute.xlu0 %755
    %759 = vset.pattern.permute.xlu0 0
    %760 = vperm.xlu0 %759, %v742
    %v761 = vpop.permute.xlu0 %760
    %v764 = vsel %vm504, %v735, 0
    %v767 = vsel %vm504, %v736, 0
    %v770 = vsel %vm504, %v737, 0
    %v773 = vsel %vm504, %v738, 0
    %775 = vmatprep.subr.mxu0 0.0
    %776 = vmatpush1.msra.mxu0 0.0
    %777 = vmatprep.subr.mxu0 0.0
    %778 = vmatpush1.msra.mxu0 0.0
    %779 = vmatprep.subr.mxu0 0.0
    %780 = vmatpush1.msra.mxu0 0.0
    %781 = vmatprep.subr.mxu0 0.0
    %782 = vmatpush1.msra.mxu0 0.0
    %783 = vmatprep.subr.mxu0 0.0
    %784 = vmatpush1.msra.mxu0 0.0
    %785 = vmatprep.subr.mxu0 0.0
    %786 = vmatpush1.msra.mxu0 0.0
    %787 = vmatprep.subr.mxu0 0.0
    %788 = vmatpush1.msra.mxu0 0.0
    %789 = vmatprep.subr.mxu0 0.0
    %790 = vmatpush1.msra.mxu0 0.0
    %791 = vmatprep.subr.mxu0 0.0
    %792 = vmatpush1.msra.mxu0 0.0
    %793 = vmatprep.subr.mxu0 0.0
    %794 = vmatpush1.msra.mxu0 0.0
    %795 = vmatprep.subr.mxu0 0.0
    %796 = vmatpush1.msra.mxu0 0.0
    %797 = vmatprep.subr.mxu0 0.0
    %798 = vmatpush1.msra.mxu0 0.0
    %799 = vmatprep.subr.mxu0 0.0
    %800 = vmatpush1.msra.mxu0 %v734
    %801 = vmatprep.subr.mxu0 0.0
    %802 = vmatpush1.msra.mxu0 %v733
    %803 = vmatprep.subr.mxu0 0.0
    %804 = vmatpush1.msra.mxu0 %v732
    %805 = vmatprep.subr.mxu0 0.0
    %806 = vmatpush1.msra.mxu0 %v731
    %807 = vmatprep.subr.mxu0 0.0
    %808 = vmatpush2.msra.mxu0 0.0
    %809 = vmatprep.subr.mxu0 0.0
    %810 = vmatpush2.msra.mxu0 0.0
    %811 = vmatprep.subr.mxu0 0.0
    %812 = vmatpush2.msra.mxu0 0.0
    %813 = vmatprep.subr.mxu0 0.0
    %814 = vmatpush2.msra.mxu0 0.0
    %815 = vmatprep.subr.mxu0 0.0
    %816 = vmatpush2.msra.mxu0 0.0
    %817 = vmatprep.subr.mxu0 0.0
    %818 = vmatpush2.msra.mxu0 0.0
    %819 = vmatprep.subr.mxu0 0.0
    %820 = vmatpush2.msra.mxu0 0.0
    %821 = vmatprep.subr.mxu0 0.0
    %822 = vmatpush2.msra.mxu0 0.0
    %823 = vmatprep.subr.mxu0 0.0
    %824 = vmatpush2.msra.mxu0 0.0
    %825 = vmatprep.subr.mxu0 0.0
    %826 = vmatpush2.msra.mxu0 0.0
    %827 = vmatprep.subr.mxu0 0.0
    %828 = vmatpush2.msra.mxu0 0.0
    %829 = vmatprep.subr.mxu0 0.0
    %830 = vmatpush2.msra.mxu0 0.0
    %831 = vmatprep.subr.mxu0 0.0
    %832 = vmatpush2.msra.mxu0 0.0
    %833 = vmatprep.subr.mxu0 0.0
    %834 = vmatpush2.msra.mxu0 0.0
    %835 = vmatprep.subr.mxu0 0.0
    %836 = vmatpush2.msra.mxu0 0.0
    %837 = vmatprep.subr.mxu0 0.0
    %838 = vmatpush2.msra.mxu0 0.0
    %839 = vmatprep.mubr.f32.mxu0 0.0
    %840 = vmatmul.mubr.f32.gmra.mxu0 %v764
    %v841 = vpop.f32.mrf.mxu0
    %v842 = vadd.f32 %v746, %v841
    %v843 = vpop.f32.mrf.mxu0
    %844 = vmatprep.mubr.f32.mxu0 0.0
    %845 = vmatmul.mubr.f32.gmra.mxu0 %v767
    %v846 = vpop.f32.mrf.mxu0
    %v847 = vadd.f32 %v751, %v846
    %v848 = vpop.f32.mrf.mxu0
    %849 = vmatprep.mubr.f32.mxu0 0.0
    %850 = vmatmul.mubr.f32.gmra.mxu0 %v770
    %v851 = vpop.f32.mrf.mxu0
    %v852 = vadd.f32 %v756, %v851
    %v853 = vpop.f32.mrf.mxu0
    %854 = vmatprep.mubr.f32.mxu0 0.0
    %855 = vmatmul.mubr.f32.gmra.mxu0 %v773
    %v856 = vpop.f32.mrf.mxu0
    %v857 = vadd.f32 %v761, %v856
    %v858 = vpop.f32.mrf.mxu0
    %859 = vdwg.mxu0
    %v860 = vmax.f32 %v842, 0.0
    %v861 = vmax.f32 %v847, 0.0
    %v862 = vmax.f32 %v852, 0.0
    %v863 = vmax.f32 %v857, 0.0
    %v864 = vld [vmem:[%s12] sm:$0xff]
    %v865 = vld [vmem:[%s13] sm:$0xff]
    %867 = vset.pattern.permute.xlu0 0
    %868 = vperm.xlu0 %867, %v865
    %v869 = vpop.permute.xlu0 %868
    %v872 = vsel %vm504, %v864, 0
    %874 = vmatprep.subr.mxu0 0.0
    %875 = vmatpush1.msra.mxu0 0.0
    %876 = vmatprep.subr.mxu0 0.0
    %877 = vmatpush1.msra.mxu0 0.0
    %878 = vmatprep.subr.mxu0 0.0
    %879 = vmatpush1.msra.mxu0 0.0
    %880 = vmatprep.subr.mxu0 0.0
    %881 = vmatpush1.msra.mxu0 0.0
    %882 = vmatprep.subr.mxu0 0.0
    %883 = vmatpush1.msra.mxu0 0.0
    %884 = vmatprep.subr.mxu0 0.0
    %885 = vmatpush1.msra.mxu0 0.0
    %886 = vmatprep.subr.mxu0 0.0
    %887 = vmatpush1.msra.mxu0 0.0
    %888 = vmatprep.subr.mxu0 0.0
    %889 = vmatpush1.msra.mxu0 0.0
    %890 = vmatprep.subr.mxu0 0.0
    %891 = vmatpush1.msra.mxu0 0.0
    %892 = vmatprep.subr.mxu0 0.0
    %893 = vmatpush1.msra.mxu0 0.0
    %894 = vmatprep.subr.mxu0 0.0
    %895 = vmatpush1.msra.mxu0 0.0
    %896 = vmatprep.subr.mxu0 0.0
    %897 = vmatpush1.msra.mxu0 0.0
    %898 = vmatprep.subr.mxu0 0.0
    %899 = vmatpush1.msra.mxu0 %v863
    %900 = vmatprep.subr.mxu0 0.0
    %901 = vmatpush1.msra.mxu0 %v862
    %902 = vmatprep.subr.mxu0 0.0
    %903 = vmatpush1.msra.mxu0 %v861
    %904 = vmatprep.subr.mxu0 0.0
    %905 = vmatpush1.msra.mxu0 %v860
    %906 = vmatprep.subr.mxu0 0.0
    %907 = vmatpush2.msra.mxu0 0.0
    %908 = vmatprep.subr.mxu0 0.0
    %909 = vmatpush2.msra.mxu0 0.0
    %910 = vmatprep.subr.mxu0 0.0
    %911 = vmatpush2.msra.mxu0 0.0
    %912 = vmatprep.subr.mxu0 0.0
    %913 = vmatpush2.msra.mxu0 0.0
    %914 = vmatprep.subr.mxu0 0.0
    %915 = vmatpush2.msra.mxu0 0.0
    %916 = vmatprep.subr.mxu0 0.0
    %917 = vmatpush2.msra.mxu0 0.0
    %918 = vmatprep.subr.mxu0 0.0
    %919 = vmatpush2.msra.mxu0 0.0
    %920 = vmatprep.subr.mxu0 0.0
    %921 = vmatpush2.msra.mxu0 0.0
    %922 = vmatprep.subr.mxu0 0.0
    %923 = vmatpush2.msra.mxu0 0.0
    %924 = vmatprep.subr.mxu0 0.0
    %925 = vmatpush2.msra.mxu0 0.0
    %926 = vmatprep.subr.mxu0 0.0
    %927 = vmatpush2.msra.mxu0 0.0
    %928 = vmatprep.subr.mxu0 0.0
    %929 = vmatpush2.msra.mxu0 0.0
    %930 = vmatprep.subr.mxu0 0.0
    %931 = vmatpush2.msra.mxu0 0.0
    %932 = vmatprep.subr.mxu0 0.0
    %933 = vmatpush2.msra.mxu0 0.0
    %934 = vmatprep.subr.mxu0 0.0
    %935 = vmatpush2.msra.mxu0 0.0
    %936 = vmatprep.subr.mxu0 0.0
    %937 = vmatpush2.msra.mxu0 0.0
    %938 = vmatprep.mubr.f32.mxu0 0.0
    %939 = vmatmul.mubr.f32.gmra.mxu0 %v872
    %v940 = vpop.f32.mrf.mxu0
    %v941 = vadd.f32 %v869, %v940
    %v942 = vpop.f32.mrf.mxu0
    %943 = vdwg.mxu0
    %944 = vst [vmem:[#allocation2] sm:$0xff] %v941
    // Predicated region
    $region58: #{tpu_custom_call.1} parent=1 // pred_check
      _
    $region59: #{tpu_custom_call.1} parent=1 // pred_check_branch
      %946 = sbr.rel (0) target = $region61
    $region60: #{tpu_custom_call.1} parent=1 // pred_region
      %s948 = ssub.s32 128, 128
      %949 = vsyncadd [#allocation3], %s948
      %s951 = sshll.u32 [#allocation2], 4
      %s952 = int_to_ptr.vmem [resolvable:$true] %s951
      %954 = dma.vmem_to_hbm [thread:$0]  %s952, 128, %s14, [#allocation3]
    $region61: #{tpu_custom_call.1} parent=1 // pred_fallthru
      _
    // Predicated region
    $region62: #{tpu_custom_call.1} parent=1 // pred_check
      _
    $region63: #{tpu_custom_call.1} parent=1 // pred_check_branch
      %956 = sbr.rel (0) target = $region65
    $region64: #{tpu_custom_call.1} parent=1 // pred_region
      %957 = dma.done [#allocation3], 128
    $region65: #{tpu_custom_call.1} parent=1 // pred_fallthru
      _
    %958 = vsyncpa [#allocation3], 1

</llo_original>
